<compile_context>
chip_gen: v7x
topology: tpu7x:2x2x1
jax: 0.10.0
libtpu: 0.0.40
codegen_flags: <defaults>
</compile_context>

<pallas_src>
import functools

import jax
import jax.numpy as jnp
from jax.experimental import pallas as pl
from jax.experimental.pallas import tpu as pltpu


def _round_up(n, m):
    return ((n + m - 1) // m) * m


def _cdiv(a, b):
    return (a + b - 1) // b


# ----------------------------- Pallas kernel --------------------------------

def fused_net_kernel(x_ref, wc_ref, bc_ref, w1_ref, b1_ref, w2_ref, b2_ref, o_ref):
    # x_ref : (TB, K)       flattened f32 input tile (K = C*100, may be 8-misaligned)
    # wc_ref: (K, 256)      conv folded to a dense matrix (channel-major columns)
    # bc_ref: (1, 256)      conv bias per flattened output column (f32)
    # w1_ref: (256, 128)    fc_hidden weights (cols >= 32 are zero padding)
    # b1_ref: (1, 128)      f32
    # w2_ref: (128, Ap)     output weights (rows >= 32 / cols >= A are zero)
    # b2_ref: (1, Ap)       f32
    # o_ref : (TB, Ap)      f32, lane-dense (Ap = 128)
    wc = wc_ref[...]
    x = x_ref[...].astype(wc.dtype)                       # bf16 MXU path, cast in-kernel
    a = jnp.dot(x, wc, preferred_element_type=jnp.float32)
    a = jnp.maximum(a + bc_ref[...], 0.0)                 # conv + ReLU, (TB, 256) f32

    w1 = w1_ref[...]
    h = jnp.dot(a.astype(w1.dtype), w1, preferred_element_type=jnp.float32)
    h = jnp.maximum(h + b1_ref[...], 0.0)                 # fc_hidden + ReLU (in vregs)

    w2 = w2_ref[...]
    o = jnp.dot(h.astype(w2.dtype), w2, preferred_element_type=jnp.float32) + b2_ref[...]
    o_ref[...] = o.astype(o_ref.dtype)


# --------------------------- weight preprocessing ----------------------------

def _conv_as_dense(wc):
    """Fold a 3x3 VALID conv on a 10x10 input into a dense matrix.

    wc: (4, C, 3, 3)  ->  W: (C*100, 256) such that
        x.reshape(B, C*100) @ W == conv(x, wc).reshape(B, 4*8*8)
    in channel-major order, i.e. exactly PyTorch's (B, 4, 8, 8).view(B, -1).
    """
    O, C, _, _ = wc.shape
    i = jnp.arange(10)
    h = jnp.arange(8)
    k_idx = i[:, None] - h[None, :]                    # (10, 8): tap index = i - h
    valid = (k_idx >= 0) & (k_idx < 3)
    k_idx = jnp.clip(k_idx, 0, 2)
    # w_g[o, c, i, h, j, w] = wc[o, c, i-h, j-w] where taps are in range, else 0
    w_g = wc[:, :, k_idx, :]                           # (O, C, 10, 8, 3)
    w_g = w_g[:, :, :, :, k_idx]                       # (O, C, 10, 8, 10, 8)
    mask = valid[None, None, :, :, None, None] & valid[None, None, None, None, :, :]
    w_g = jnp.where(mask, w_g, 0.0)
    # (o, c, i, h, j, w) -> (c, i, j, o, h, w) -> (C*100, O*64)
    w_g = jnp.transpose(w_g, (1, 2, 4, 0, 3, 5))
    return w_g.reshape(C * 100, O * 64)


# ------------------------------- JAX wrapper ---------------------------------

def network_forward(x, params, *, max_block_rows=256, compute_dtype=jnp.bfloat16,
                    min_parallel_tiles=2):
    """Forward pass of `Network` using a single fused Pallas TPU kernel.

    x: (B, C, 10, 10) float32, NCHW.  returns: (B, num_actions) float32.
    """
    wc, bc, w1, b1, w2, b2 = params
    B, C, H, W = x.shape
    assert (H, W) == (10, 10), "Network is defined for 10x10 inputs"
    A = w2.shape[1]

    K = C * H * W                          # flattened input features (100*C)
    N1 = 256                               # conv output features (4*8*8)
    H1 = 128                               # padded hidden width (real 32)
    A_pad = _round_up(max(A, 1), 128)      # lane-dense output width (real A)

    # --- tiny, batch-independent weight transforms (JAX glue) ---
    w_conv = _conv_as_dense(wc).astype(compute_dtype)                # (K, 256)
    b_conv = jnp.repeat(bc, 64).reshape(1, N1).astype(jnp.float32)   # bias per column
    w1_p = jnp.zeros((N1, H1), compute_dtype).at[:, :32].set(w1.astype(compute_dtype))
    b1_p = jnp.zeros((1, H1), jnp.float32).at[:, :32].set(b1)
    w2_p = jnp.zeros((H1, A_pad), compute_dtype).at[:32, :A].set(w2.astype(compute_dtype))
    b2_p = jnp.zeros((1, A_pad), jnp.float32).at[:, :A].set(b2)

    # --- balanced batch tiling; >= 2 parallel steps for v7x's two TensorCores ---
    if B >= 16:
        n_tiles = max(min_parallel_tiles, _cdiv(B, max_block_rows))
        n_tiles = _round_up(n_tiles, min_parallel_tiles)
    else:
        n_tiles = _cdiv(B, max_block_rows)        # == 1 for tiny batches
    TB = _round_up(_cdiv(B, n_tiles), 8)
    B_pad = _round_up(B, TB)

    x_flat = x.reshape(B, K)                      # no feature-dim pad: full-dim block is legal
    if B_pad != B:
        x_flat = jnp.pad(x_flat, ((0, B_pad - B), (0, 0)))

    w_item = jnp.dtype(compute_dtype).itemsize
    cost = pl.CostEstimate(
        flops=2 * B_pad * (K * N1 + N1 * H1 + H1 * A_pad),
        transcendentals=0,
        bytes_accessed=(B_pad * K * 4 + B_pad * A_pad * 4
                        + (K * N1 + N1 * H1 + H1 * A_pad) * w_item
                        + (N1 + H1 + A_pad) * 4),
    )

    out = pl.pallas_call(
        fused_net_kernel,
        out_shape=jax.ShapeDtypeStruct((B_pad, A_pad), jnp.float32),
        grid=(B_pad // TB,),
        in_specs=[
            pl.BlockSpec((TB, K), lambda i: (i, 0)),       # x tile (full K as last dim)
            pl.BlockSpec((K, N1), lambda i: (0, 0)),       # conv-as-dense weights
            pl.BlockSpec((1, N1), lambda i: (0, 0)),       # conv bias
            pl.BlockSpec((N1, H1), lambda i: (0, 0)),      # fc_hidden weights (padded)
            pl.BlockSpec((1, H1), lambda i: (0, 0)),       # fc_hidden bias
            pl.BlockSpec((H1, A_pad), lambda i: (0, 0)),   # output weights (padded)
            pl.BlockSpec((1, A_pad), lambda i: (0, 0)),    # output bias
        ],
        out_specs=pl.BlockSpec((TB, A_pad), lambda i: (i, 0)),
        compiler_params=pltpu.CompilerParams(
            dimension_semantics=("parallel",)),
        cost_estimate=cost,
    )(x_flat, w_conv, b_conv, w1_p, b1_p, w2_p, b2_p)

    return out[:B, :A]


# ------------------------- parameter initialization --------------------------

def init_params(key, in_channels, num_actions):
    """Deterministic init (uniform, PyTorch-like 1/sqrt(fan_in) bounds)."""
    k = jax.random.split(key, 6)
    fan_conv = in_channels * 9
    wc = jax.random.uniform(k[0], (4, in_channels, 3, 3), jnp.float32,
                            -1.0 / jnp.sqrt(fan_conv), 1.0 / jnp.sqrt(fan_conv))
    bc = jax.random.uniform(k[1], (4,), jnp.float32,
                            -1.0 / jnp.sqrt(fan_conv), 1.0 / jnp.sqrt(fan_conv))
    n_lin = 8 * 8 * 4  # 256
    w1 = jax.random.uniform(k[2], (n_lin, 32), jnp.float32,
                            -1.0 / jnp.sqrt(n_lin), 1.0 / jnp.sqrt(n_lin))
    b1 = jax.random.uniform(k[3], (32,), jnp.float32,
                            -1.0 / jnp.sqrt(n_lin), 1.0 / jnp.sqrt(n_lin))
    w2 = jax.random.uniform(k[4], (32, num_actions), jnp.float32,
                            -1.0 / jnp.sqrt(32.0), 1.0 / jnp.sqrt(32.0))
    b2 = jax.random.uniform(k[5], (num_actions,), jnp.float32,
                            -1.0 / jnp.sqrt(32.0), 1.0 / jnp.sqrt(32.0))
    return (wc, bc, w1, b1, w2, b2)


# ------------------------------ pure-JAX reference ---------------------------

def network_reference(x, params):
    wc, bc, w1, b1, w2, b2 = params
    conv = jax.lax.conv_general_dilated(
        x, wc, window_strides=(1, 1), padding="VALID",
        dimension_numbers=("NCHW", "OIHW", "NCHW"))
    conv = jnp.maximum(conv + bc.reshape(1, 4, 1, 1), 0.0)      # (B, 4, 8, 8)
    flat = conv.reshape(conv.shape[0], -1)                      # (B, 256)
    h = jnp.maximum(flat @ w1 + b1, 0.0)
    return h @ w2 + b2


# ---------------------------------- main -------------------------------------

if __name__ == "__main__":
    B, C, A = 2, 4, 6
    key = jax.random.PRNGKey(0)
    kx, kp = jax.random.split(key)
    x = jax.random.normal(kx, (B, C, 10, 10), dtype=jnp.float32)
    params = init_params(kp, C, A)

    ref = network_reference(x, params)

    # exact-math path (f32 on the MXU) -> tight tolerance
    fwd_f32 = jax.jit(functools.partial(network_forward, compute_dtype=jnp.float32))
    out_f32 = jax.block_until_ready(fwd_f32(x, params))
    assert out_f32.shape == (B, A)
    assert jnp.allclose(out_f32, ref, atol=1e-4, rtol=1e-4), "f32 mismatch vs reference"

    # default fast path (bf16 MXU inputs, f32 accumulation) -> relaxed tolerance
    fwd = jax.jit(network_forward)
    out_bf16 = jax.block_until_ready(fwd(x, params))
    assert out_bf16.shape == (B, A)
    assert jnp.allclose(out_bf16, ref, atol=2e-2, rtol=2e-2), "bf16 mismatch vs reference"

    # larger batch: exercises the multi-tile / megacore-parallel grid and row padding
    B2 = 70
    x2 = jax.random.normal(jax.random.PRNGKey(1), (B2, C, 10, 10), dtype=jnp.float32)
    out2 = jax.block_until_ready(fwd(x2, params))
    assert jnp.allclose(out2, network_reference(x2, params), atol=2e-2, rtol=2e-2)

    print("KERNEL_OK")
</pallas_src>

<mosaic_0001>
module attributes {stable_mosaic.version = 11 : i64} {
  func.func @fused_net_kernel(%arg0: i32, %arg1: memref<8x400xf32, #tpu.memory_space<vmem>>, %arg2: memref<400x256xf32, #tpu.memory_space<vmem>>, %arg3: memref<1x256xf32, #tpu.memory_space<vmem>>, %arg4: memref<256x128xf32, #tpu.memory_space<vmem>>, %arg5: memref<1x128xf32, #tpu.memory_space<vmem>>, %arg6: memref<128x128xf32, #tpu.memory_space<vmem>>, %arg7: memref<1x128xf32, #tpu.memory_space<vmem>>, %arg8: memref<8x128xf32, #tpu.memory_space<vmem>>) attributes {dimension_semantics = [#tpu.dimension_semantics<parallel>], iteration_bounds = array<i64: 1>, scalar_prefetch = 0 : i64, scratch_operands = 0 : i64, tpu.core_type = #tpu.core_type<tc>, window_params = [{transform_indices = @transform_0, window_bounds = array<i64: 8, 400>}, {pipeline_mode = #tpu.pipeline_mode<synchronous>, transform_indices = @transform_1, window_bounds = array<i64: 400, 256>}, {pipeline_mode = #tpu.pipeline_mode<synchronous>, transform_indices = @transform_2, window_bounds = array<i64: 1, 256>}, {pipeline_mode = #tpu.pipeline_mode<synchronous>, transform_indices = @transform_3, window_bounds = array<i64: 256, 128>}, {pipeline_mode = #tpu.pipeline_mode<synchronous>, transform_indices = @transform_4, window_bounds = array<i64: 1, 128>}, {pipeline_mode = #tpu.pipeline_mode<synchronous>, transform_indices = @transform_5, window_bounds = array<i64: 128, 128>}, {pipeline_mode = #tpu.pipeline_mode<synchronous>, transform_indices = @transform_6, window_bounds = array<i64: 1, 128>}, {transform_indices = @transform_7, window_bounds = array<i64: 8, 128>}]} {
    %c0 = arith.constant 0 : index
    %c0_0 = arith.constant 0 : index
    %0 = vector.load %arg2[%c0, %c0_0] : memref<400x256xf32, #tpu.memory_space<vmem>>, vector<400x256xf32>
    %c0_1 = arith.constant 0 : index
    %c0_2 = arith.constant 0 : index
    %1 = vector.load %arg1[%c0_1, %c0_2] : memref<8x400xf32, #tpu.memory_space<vmem>>, vector<8x400xf32>
    %cst = arith.constant dense<0.000000e+00> : vector<8x256xf32>
    %2 = tpu.matmul %1, %0, %cst {dimension_numbers = #tpu.dot_dimension_numbers<[1], [0], [0], [1], [0, 0, 1, 1], [], []>} : vector<8x400xf32>, vector<400x256xf32>, vector<8x256xf32> -> vector<8x256xf32>
    %c0_3 = arith.constant 0 : index
    %c0_4 = arith.constant 0 : index
    %3 = vector.load %arg3[%c0_3, %c0_4] : memref<1x256xf32, #tpu.memory_space<vmem>>, vector<1x256xf32>
    %4 = vector.broadcast %3 : vector<1x256xf32> to vector<8x256xf32>
    %5 = arith.addf %2, %4 : vector<8x256xf32>
    %cst_5 = arith.constant 0.000000e+00 : f32
    %6 = vector.broadcast %cst_5 : f32 to vector<8x256xf32>
    %7 = arith.maximumf %5, %6 : vector<8x256xf32>
    %c0_6 = arith.constant 0 : index
    %c0_7 = arith.constant 0 : index
    %8 = vector.load %arg4[%c0_6, %c0_7] : memref<256x128xf32, #tpu.memory_space<vmem>>, vector<256x128xf32>
    %cst_8 = arith.constant dense<0.000000e+00> : vector<8x128xf32>
    %9 = tpu.matmul %7, %8, %cst_8 {dimension_numbers = #tpu.dot_dimension_numbers<[1], [0], [0], [1], [0, 0, 1, 1], [], []>} : vector<8x256xf32>, vector<256x128xf32>, vector<8x128xf32> -> vector<8x128xf32>
    %c0_9 = arith.constant 0 : index
    %c0_10 = arith.constant 0 : index
    %10 = vector.load %arg5[%c0_9, %c0_10] : memref<1x128xf32, #tpu.memory_space<vmem>>, vector<1x128xf32>
    %11 = vector.broadcast %10 : vector<1x128xf32> to vector<8x128xf32>
    %12 = arith.addf %9, %11 : vector<8x128xf32>
    %cst_11 = arith.constant 0.000000e+00 : f32
    %13 = vector.broadcast %cst_11 : f32 to vector<8x128xf32>
    %14 = arith.maximumf %12, %13 : vector<8x128xf32>
    %c0_12 = arith.constant 0 : index
    %c0_13 = arith.constant 0 : index
    %15 = vector.load %arg6[%c0_12, %c0_13] : memref<128x128xf32, #tpu.memory_space<vmem>>, vector<128x128xf32>
    %cst_14 = arith.constant dense<0.000000e+00> : vector<8x128xf32>
    %16 = tpu.matmul %14, %15, %cst_14 {dimension_numbers = #tpu.dot_dimension_numbers<[1], [0], [0], [1], [0, 0, 1, 1], [], []>} : vector<8x128xf32>, vector<128x128xf32>, vector<8x128xf32> -> vector<8x128xf32>
    %c0_15 = arith.constant 0 : index
    %c0_16 = arith.constant 0 : index
    %17 = vector.load %arg7[%c0_15, %c0_16] : memref<1x128xf32, #tpu.memory_space<vmem>>, vector<1x128xf32>
    %18 = vector.broadcast %17 : vector<1x128xf32> to vector<8x128xf32>
    %19 = arith.addf %16, %18 : vector<8x128xf32>
    %c0_17 = arith.constant 0 : index
    %c0_18 = arith.constant 0 : index
    %20 = vector.load %arg8[%c0_17, %c0_18] : memref<8x128xf32, #tpu.memory_space<vmem>>, vector<8x128xf32>
    tpu.vector_store %arg8[%c0_17, %c0_18], %19 {strides = array<i32>} : memref<8x128xf32, #tpu.memory_space<vmem>>, vector<8x128xf32>,
    return
  }
  func.func @transform_0(%arg0: i32) -> (i32, i32) {
    %c0_i32 = arith.constant 0 : i32
    %c0_i32_0 = arith.constant 0 : i32
    return %arg0, %c0_i32 : i32, i32
  }
  func.func @transform_1(%arg0: i32) -> (i32, i32) {
    %c0_i32 = arith.constant 0 : i32
    %c0_i32_0 = arith.constant 0 : i32
    %c0_i32_1 = arith.constant 0 : i32
    return %c0_i32, %c0_i32_0 : i32, i32
  }
  func.func @transform_2(%arg0: i32) -> (i32, i32) {
    %c0_i32 = arith.constant 0 : i32
    %c0_i32_0 = arith.constant 0 : i32
    %c0_i32_1 = arith.constant 0 : i32
    return %c0_i32, %c0_i32_0 : i32, i32
  }
  func.func @transform_3(%arg0: i32) -> (i32, i32) {
    %c0_i32 = arith.constant 0 : i32
    %c0_i32_0 = arith.constant 0 : i32
    %c0_i32_1 = arith.constant 0 : i32
    return %c0_i32, %c0_i32_0 : i32, i32
  }
  func.func @transform_4(%arg0: i32) -> (i32, i32) {
    %c0_i32 = arith.constant 0 : i32
    %c0_i32_0 = arith.constant 0 : i32
    %c0_i32_1 = arith.constant 0 : i32
    return %c0_i32, %c0_i32_0 : i32, i32
  }
  func.func @transform_5(%arg0: i32) -> (i32, i32) {
    %c0_i32 = arith.constant 0 : i32
    %c0_i32_0 = arith.constant 0 : i32
    %c0_i32_1 = arith.constant 0 : i32
    return %c0_i32, %c0_i32_0 : i32, i32
  }
  func.func @transform_6(%arg0: i32) -> (i32, i32) {
    %c0_i32 = arith.constant 0 : i32
    %c0_i32_0 = arith.constant 0 : i32
    %c0_i32_1 = arith.constant 0 : i32
    return %c0_i32, %c0_i32_0 : i32, i32
  }
  func.func @transform_7(%arg0: i32) -> (i32, i32) {
    %c0_i32 = arith.constant 0 : i32
    %c0_i32_0 = arith.constant 0 : i32
    return %arg0, %c0_i32 : i32, i32
  }
}

</mosaic_0001>

<llo_original>
// kernel: network_forward.1
$region0: #{network_forward.1}
  #allocation0 [shape = 'u32[]', space=smem, size = 0x4, offset = 0x4, fixed_abs, tag = 'smem constant byte address 0x4 - core index']
  #allocation1 [shape = 'u32[144,128]{1,0:T(1,128)}', space=vmem, size = 0x12000, scoped, tag = 'internal scratch']
  %s0 = inlined_call_operand.vmem [shape: f32[8,400], index: 0, kind: input, shape index: {}]
  %s1 = inlined_call_operand.vmem [shape: f32[400,256], index: 1, kind: input, shape index: {}]
  %s2 = inlined_call_operand.vmem [shape: f32[1,256], index: 2, kind: input, shape index: {}]
  %s3 = inlined_call_operand.vmem [shape: f32[256,128], index: 3, kind: input, shape index: {}]
  %s4 = inlined_call_operand.vmem [shape: f32[1,128], index: 4, kind: input, shape index: {}]
  %s5 = inlined_call_operand.vmem [shape: f32[128,128], index: 5, kind: input, shape index: {}]
  %s6 = inlined_call_operand.vmem [shape: f32[1,128], index: 6, kind: input, shape index: {}]
  %s7 = inlined_call_operand.vmem [shape: f32[8,128], index: 7, kind: output, shape index: {}]
  %s8 = sld [smem:[#allocation0]]
  $region38: #{network_forward.1} parent=0
    _
  %s10 = ssub.s32 1, %s8
  %s11 = scalar_select 0, %s10, %s8
  // Predicated region
  $region2: #{network_forward.1} parent=0 // pred_check
    _
  $region3: #{network_forward.1} parent=0 // pred_check_branch
    %13 = sbr.rel (0) target = $region5
  $region4: #{network_forward.1} parent=0 // pred_region
    _
  $region5: #{network_forward.1} parent=0 // pred_fallthru
    _
  // Predicated region
  $region6: #{network_forward.1} parent=0 // pred_check
    _
  $region7: #{network_forward.1} parent=0 // pred_check_branch
    %15 = sbr.rel (0) target = $region9
  $region8: #{network_forward.1} parent=0 // pred_region
    _
  $region9: #{network_forward.1} parent=0 // pred_fallthru
    _
  // Predicated region
  $region10: #{network_forward.1} parent=0 // pred_check
    _
  $region11: #{network_forward.1} parent=0 // pred_check_branch
    %17 = sbr.rel (0) target = $region13
  $region12: #{network_forward.1} parent=0 // pred_region
    _
  $region13: #{network_forward.1} parent=0 // pred_fallthru
    _
  // Predicated region
  $region14: #{network_forward.1} parent=0 // pred_check
    _
  $region15: #{network_forward.1} parent=0 // pred_check_branch
    %19 = sbr.rel (0) target = $region17
  $region16: #{network_forward.1} parent=0 // pred_region
    _
  $region17: #{network_forward.1} parent=0 // pred_fallthru
    _
  // Predicated region
  $region18: #{network_forward.1} parent=0 // pred_check
    _
  $region19: #{network_forward.1} parent=0 // pred_check_branch
    %21 = sbr.rel (0) target = $region21
  $region20: #{network_forward.1} parent=0 // pred_region
    _
  $region21: #{network_forward.1} parent=0 // pred_fallthru
    _
  // Predicated region
  $region22: #{network_forward.1} parent=0 // pred_check
    _
  $region23: #{network_forward.1} parent=0 // pred_check_branch
    %23 = sbr.rel (0) target = $region25
  $region24: #{network_forward.1} parent=0 // pred_region
    _
  $region25: #{network_forward.1} parent=0 // pred_fallthru
    _
  // Predicated region
  $region26: #{network_forward.1} parent=0 // pred_check
    _
  $region27: #{network_forward.1} parent=0 // pred_check_branch
    %25 = sbr.rel (0) target = $region29
  $region28: #{network_forward.1} parent=0 // pred_region
    _
  $region29: #{network_forward.1} parent=0 // pred_fallthru
    _
  %v26 = vld [vmem:[%s1] sm:$0xff]
  %v27 = vld [vmem:[%s1 + $0x8] sm:$0xff]
  %v28 = vld [vmem:[%s1 + $0x10] sm:$0xff]
  %v29 = vld [vmem:[%s1 + $0x18] sm:$0xff]
  %v30 = vld [vmem:[%s1 + $0x20] sm:$0xff]
  %v31 = vld [vmem:[%s1 + $0x28] sm:$0xff]
  %v32 = vld [vmem:[%s1 + $0x30] sm:$0xff]
  %v33 = vld [vmem:[%s1 + $0x38] sm:$0xff]
  %v34 = vld [vmem:[%s1 + $0x40] sm:$0xff]
  %v35 = vld [vmem:[%s1 + $0x48] sm:$0xff]
  %v36 = vld [vmem:[%s1 + $0x50] sm:$0xff]
  %v37 = vld [vmem:[%s1 + $0x58] sm:$0xff]
  %v38 = vld [vmem:[%s1 + $0x60] sm:$0xff]
  %v39 = vld [vmem:[%s1 + $0x68] sm:$0xff]
  %v40 = vld [vmem:[%s1 + $0x70] sm:$0xff]
  %v41 = vld [vmem:[%s1 + $0x78] sm:$0xff]
  %v42 = vld [vmem:[%s1 + $0x80] sm:$0xff]
  %v43 = vld [vmem:[%s1 + $0x88] sm:$0xff]
  %v44 = vld [vmem:[%s1 + $0x90] sm:$0xff]
  %v45 = vld [vmem:[%s1 + $0x98] sm:$0xff]
  %v46 = vld [vmem:[%s1 + $0xa0] sm:$0xff]
  %v47 = vld [vmem:[%s1 + $0xa8] sm:$0xff]
  %v48 = vld [vmem:[%s1 + $0xb0] sm:$0xff]
  %v49 = vld [vmem:[%s1 + $0xb8] sm:$0xff]
  %v50 = vld [vmem:[%s1 + $0xc0] sm:$0xff]
  %v51 = vld [vmem:[%s1 + $0xc8] sm:$0xff]
  %v52 = vld [vmem:[%s1 + $0xd0] sm:$0xff]
  %v53 = vld [vmem:[%s1 + $0xd8] sm:$0xff]
  %v54 = vld [vmem:[%s1 + $0xe0] sm:$0xff]
  %v55 = vld [vmem:[%s1 + $0xe8] sm:$0xff]
  %v56 = vld [vmem:[%s1 + $0xf0] sm:$0xff]
  %v57 = vld [vmem:[%s1 + $0xf8] sm:$0xff]
  %v58 = vld [vmem:[%s1 + $0x100] sm:$0xff]
  %v59 = vld [vmem:[%s1 + $0x108] sm:$0xff]
  %v60 = vld [vmem:[%s1 + $0x110] sm:$0xff]
  %v61 = vld [vmem:[%s1 + $0x118] sm:$0xff]
  %v62 = vld [vmem:[%s1 + $0x120] sm:$0xff]
  %v63 = vld [vmem:[%s1 + $0x128] sm:$0xff]
  %v64 = vld [vmem:[%s1 + $0x130] sm:$0xff]
  %v65 = vld [vmem:[%s1 + $0x138] sm:$0xff]
  %v66 = vld [vmem:[%s1 + $0x140] sm:$0xff]
  %v67 = vld [vmem:[%s1 + $0x148] sm:$0xff]
  %v68 = vld [vmem:[%s1 + $0x150] sm:$0xff]
  %v69 = vld [vmem:[%s1 + $0x158] sm:$0xff]
  %v70 = vld [vmem:[%s1 + $0x160] sm:$0xff]
  %v71 = vld [vmem:[%s1 + $0x168] sm:$0xff]
  %v72 = vld [vmem:[%s1 + $0x170] sm:$0xff]
  %v73 = vld [vmem:[%s1 + $0x178] sm:$0xff]
  %v74 = vld [vmem:[%s1 + $0x180] sm:$0xff]
  %v75 = vld [vmem:[%s1 + $0x188] sm:$0xff]
  %v76 = vld [vmem:[%s1 + $0x190] sm:$0xff]
  %v77 = vld [vmem:[%s1 + $0x198] sm:$0xff]
  %v78 = vld [vmem:[%s1 + $0x1a0] sm:$0xff]
  %v79 = vld [vmem:[%s1 + $0x1a8] sm:$0xff]
  %v80 = vld [vmem:[%s1 + $0x1b0] sm:$0xff]
  %v81 = vld [vmem:[%s1 + $0x1b8] sm:$0xff]
  %v82 = vld [vmem:[%s1 + $0x1c0] sm:$0xff]
  %v83 = vld [vmem:[%s1 + $0x1c8] sm:$0xff]
  %v84 = vld [vmem:[%s1 + $0x1d0] sm:$0xff]
  %v85 = vld [vmem:[%s1 + $0x1d8] sm:$0xff]
  %v86 = vld [vmem:[%s1 + $0x1e0] sm:$0xff]
  %v87 = vld [vmem:[%s1 + $0x1e8] sm:$0xff]
  %v88 = vld [vmem:[%s1 + $0x1f0] sm:$0xff]
  %v89 = vld [vmem:[%s1 + $0x1f8] sm:$0xff]
  %v90 = vld [vmem:[%s1 + $0x200] sm:$0xff]
  %v91 = vld [vmem:[%s1 + $0x208] sm:$0xff]
  %v92 = vld [vmem:[%s1 + $0x210] sm:$0xff]
  %v93 = vld [vmem:[%s1 + $0x218] sm:$0xff]
  %v94 = vld [vmem:[%s1 + $0x220] sm:$0xff]
  %v95 = vld [vmem:[%s1 + $0x228] sm:$0xff]
  %v96 = vld [vmem:[%s1 + $0x230] sm:$0xff]
  %v97 = vld [vmem:[%s1 + $0x238] sm:$0xff]
  %v98 = vld [vmem:[%s1 + $0x240] sm:$0xff]
  %v99 = vld [vmem:[%s1 + $0x248] sm:$0xff]
  %v100 = vld [vmem:[%s1 + $0x250] sm:$0xff]
  %v101 = vld [vmem:[%s1 + $0x258] sm:$0xff]
  %v102 = vld [vmem:[%s1 + $0x260] sm:$0xff]
  %v103 = vld [vmem:[%s1 + $0x268] sm:$0xff]
  %v104 = vld [vmem:[%s1 + $0x270] sm:$0xff]
  %v105 = vld [vmem:[%s1 + $0x278] sm:$0xff]
  %v106 = vld [vmem:[%s1 + $0x280] sm:$0xff]
  %v107 = vld [vmem:[%s1 + $0x288] sm:$0xff]
  %v108 = vld [vmem:[%s1 + $0x290] sm:$0xff]
  %v109 = vld [vmem:[%s1 + $0x298] sm:$0xff]
  %v110 = vld [vmem:[%s1 + $0x2a0] sm:$0xff]
  %v111 = vld [vmem:[%s1 + $0x2a8] sm:$0xff]
  %v112 = vld [vmem:[%s1 + $0x2b0] sm:$0xff]
  %v113 = vld [vmem:[%s1 + $0x2b8] sm:$0xff]
  %v114 = vld [vmem:[%s1 + $0x2c0] sm:$0xff]
  %v115 = vld [vmem:[%s1 + $0x2c8] sm:$0xff]
  %v116 = vld [vmem:[%s1 + $0x2d0] sm:$0xff]
  %v117 = vld [vmem:[%s1 + $0x2d8] sm:$0xff]
  %v118 = vld [vmem:[%s1 + $0x2e0] sm:$0xff]
  %v119 = vld [vmem:[%s1 + $0x2e8] sm:$0xff]
  %v120 = vld [vmem:[%s1 + $0x2f0] sm:$0xff]
  %v121 = vld [vmem:[%s1 + $0x2f8] sm:$0xff]
  %v122 = vld [vmem:[%s1 + $0x300] sm:$0xff]
  %v123 = vld [vmem:[%s1 + $0x308] sm:$0xff]
  %v124 = vld [vmem:[%s1 + $0x310] sm:$0xff]
  %v125 = vld [vmem:[%s1 + $0x318] sm:$0xff]
  %v126 = vld [vmem:[%s0] sm:$0xff]
  %v127 = vld [vmem:[%s0 + $0x8] sm:$0xff]
  %v128 = vld [vmem:[%s0 + $0x10] sm:$0xff]
  %v129 = vld [vmem:[%s0 + $0x18] sm:$0xff]
  %v130 = vld [vmem:[%s2] sm:$0x3]
  %v132 = vlaneseq
  %v133 = vshrl.u32 %v132, 7
  %v134 = vsub.s32 0, %v133
  %v135 = vrot.slane %v130, %v134
  %v136 = vlaneseq
  %v137 = vshrl.u32 %v136, 7
  %v138 = vsub.s32 1, %v137
  %v139 = vrot.slane %v130, %v138
  %vm142 = vcmask 130048
  %v144 = vsel %vm142, %v129, 0
  %146 = vmatprep.subr.mxu0 %v27
  %147 = vmatpush1.msra.mxu0 %v26
  %148 = vmatprep.subr.mxu0 %v29
  %149 = vmatpush1.msra.mxu0 %v28
  %150 = vmatprep.subr.mxu0 %v31
  %151 = vmatpush1.msra.mxu0 %v30
  %152 = vmatprep.subr.mxu0 %v33
  %153 = vmatpush1.msra.mxu0 %v32
  %154 = vmatprep.subr.mxu0 %v35
  %155 = vmatpush1.msra.mxu0 %v34
  %156 = vmatprep.subr.mxu0 %v37
  %157 = vmatpush1.msra.mxu0 %v36
  %158 = vmatprep.subr.mxu0 %v39
  %159 = vmatpush1.msra.mxu0 %v38
  %160 = vmatprep.subr.mxu0 %v41
  %161 = vmatpush1.msra.mxu0 %v40
  %162 = vmatprep.subr.mxu0 %v43
  %163 = vmatpush1.msra.mxu0 %v42
  %164 = vmatprep.subr.mxu0 %v45
  %165 = vmatpush1.msra.mxu0 %v44
  %166 = vmatprep.subr.mxu0 %v47
  %167 = vmatpush1.msra.mxu0 %v46
  %168 = vmatprep.subr.mxu0 %v49
  %169 = vmatpush1.msra.mxu0 %v48
  %170 = vmatprep.subr.mxu0 %v51
  %171 = vmatpush1.msra.mxu0 %v50
  %172 = vmatprep.subr.mxu0 %v53
  %173 = vmatpush1.msra.mxu0 %v52
  %174 = vmatprep.subr.mxu0 %v55
  %175 = vmatpush1.msra.mxu0 %v54
  %176 = vmatprep.subr.mxu0 %v57
  %177 = vmatpush1.msra.mxu0 %v56
  %178 = vmatprep.subr.mxu0 %v59
  %179 = vmatpush1.msra.mxu0 %v58
  %180 = vmatprep.subr.mxu0 %v61
  %181 = vmatpush1.msra.mxu0 %v60
  %182 = vmatprep.subr.mxu0 %v63
  %183 = vmatpush1.msra.mxu0 %v62
  %184 = vmatprep.subr.mxu0 %v65
  %185 = vmatpush1.msra.mxu0 %v64
  %186 = vmatprep.subr.mxu0 %v67
  %187 = vmatpush1.msra.mxu0 %v66
  %188 = vmatprep.subr.mxu0 %v69
  %189 = vmatpush1.msra.mxu0 %v68
  %190 = vmatprep.subr.mxu0 %v71
  %191 = vmatpush1.msra.mxu0 %v70
  %192 = vmatprep.subr.mxu0 %v73
  %193 = vmatpush1.msra.mxu0 %v72
  %194 = vmatprep.subr.mxu0 %v75
  %195 = vmatpush1.msra.mxu0 %v74
  %196 = vmatprep.subr.mxu0 %v77
  %197 = vmatpush1.msra.mxu0 %v76
  %198 = vmatprep.subr.mxu0 %v79
  %199 = vmatpush1.msra.mxu0 %v78
  %200 = vmatprep.subr.mxu0 %v81
  %201 = vmatpush1.msra.mxu0 %v80
  %202 = vmatprep.subr.mxu0 %v83
  %203 = vmatpush1.msra.mxu0 %v82
  %204 = vmatprep.subr.mxu0 %v85
  %205 = vmatpush1.msra.mxu0 %v84
  %206 = vmatprep.subr.mxu0 %v87
  %207 = vmatpush1.msra.mxu0 %v86
  %208 = vmatprep.subr.mxu0 %v89
  %209 = vmatpush1.msra.mxu0 %v88
  %210 = vmatprep.mubr.f32.mxu0 %v127
  %211 = vmatmul.mubr.f32.gmra.mrb[0].mxu0 %v126
  %v212 = vpop.f32.mrb[0].mxu0
  %v213 = vadd.f32 %v135, %v212
  %v214 = vpop.f32.mrb[0].mxu0
  %v215 = vadd.f32 %v139, %v214
  %216 = vdwg.mxu0
  %217 = vmatprep.subr.mxu0 %v91
  %218 = vmatpush1.msra.mxu0 %v90
  %219 = vmatprep.subr.mxu0 %v93
  %220 = vmatpush1.msra.mxu0 %v92
  %221 = vmatprep.subr.mxu0 %v95
  %222 = vmatpush1.msra.mxu0 %v94
  %223 = vmatprep.subr.mxu0 %v97
  %224 = vmatpush1.msra.mxu0 %v96
  %225 = vmatprep.subr.mxu0 %v99
  %226 = vmatpush1.msra.mxu0 %v98
  %227 = vmatprep.subr.mxu0 %v101
  %228 = vmatpush1.msra.mxu0 %v100
  %229 = vmatprep.subr.mxu0 %v103
  %230 = vmatpush1.msra.mxu0 %v102
  %231 = vmatprep.subr.mxu0 %v105
  %232 = vmatpush1.msra.mxu0 %v104
  %233 = vmatprep.subr.mxu0 %v107
  %234 = vmatpush1.msra.mxu0 %v106
  %235 = vmatprep.subr.mxu0 %v109
  %236 = vmatpush1.msra.mxu0 %v108
  %237 = vmatprep.subr.mxu0 %v111
  %238 = vmatpush1.msra.mxu0 %v110
  %239 = vmatprep.subr.mxu0 %v113
  %240 = vmatpush1.msra.mxu0 %v112
  %241 = vmatprep.subr.mxu0 %v115
  %242 = vmatpush1.msra.mxu0 %v114
  %243 = vmatprep.subr.mxu0 %v117
  %244 = vmatpush1.msra.mxu0 %v116
  %245 = vmatprep.subr.mxu0 %v119
  %246 = vmatpush1.msra.mxu0 %v118
  %247 = vmatprep.subr.mxu0 %v121
  %248 = vmatpush1.msra.mxu0 %v120
  %249 = vmatprep.subr.mxu0 %v123
  %250 = vmatpush1.msra.mxu0 %v122
  %251 = vmatprep.subr.mxu0 %v125
  %252 = vmatpush1.msra.mxu0 %v124
  %253 = vmatprep.subr.mxu0 0.0
  %254 = vmatpush1.msra.mxu0 0.0
  %255 = vmatprep.subr.mxu0 0.0
  %256 = vmatpush1.msra.mxu0 0.0
  %257 = vmatprep.subr.mxu0 0.0
  %258 = vmatpush1.msra.mxu0 0.0
  %259 = vmatprep.subr.mxu0 0.0
  %260 = vmatpush1.msra.mxu0 0.0
  %261 = vmatprep.subr.mxu0 0.0
  %262 = vmatpush1.msra.mxu0 0.0
  %263 = vmatprep.subr.mxu0 0.0
  %264 = vmatpush1.msra.mxu0 0.0
  %265 = vmatprep.subr.mxu0 0.0
  %266 = vmatpush1.msra.mxu0 0.0
  %267 = vmatprep.subr.mxu0 0.0
  %268 = vmatpush1.msra.mxu0 0.0
  %269 = vmatprep.subr.mxu0 0.0
  %270 = vmatpush1.msra.mxu0 0.0
  %271 = vmatprep.subr.mxu0 0.0
  %272 = vmatpush1.msra.mxu0 0.0
  %273 = vmatprep.subr.mxu0 0.0
  %274 = vmatpush1.msra.mxu0 0.0
  %275 = vmatprep.subr.mxu0 0.0
  %276 = vmatpush1.msra.mxu0 0.0
  %277 = vmatprep.subr.mxu0 0.0
  %278 = vmatpush1.msra.mxu0 0.0
  %279 = vmatprep.subr.mxu0 0.0
  %280 = vmatpush1.msra.mxu0 0.0
  %281 = vmatprep.mubr.f32.mxu0 %v144
  %282 = vmatmul.mubr.f32.gmra.mrb[0].mxu0 %v128
  %v283 = vpop.f32.mrb[0].mxu0
  %v284 = vadd.f32 %v213, %v283
  %v285 = vpop.f32.mrb[0].mxu0
  %v286 = vadd.f32 %v215, %v285
  %287 = vdwg.mxu0
  %v288 = vmax.f32 %v284, 0.0
  %v289 = vmax.f32 %v286, 0.0
  %v290 = vld [vmem:[%s3] sm:$0xff]
  %v291 = vld [vmem:[%s3 + $0x8] sm:$0xff]
  %v292 = vld [vmem:[%s3 + $0x10] sm:$0xff]
  %v293 = vld [vmem:[%s3 + $0x18] sm:$0xff]
  %v294 = vld [vmem:[%s3 + $0x20] sm:$0xff]
  %v295 = vld [vmem:[%s3 + $0x28] sm:$0xff]
  %v296 = vld [vmem:[%s3 + $0x30] sm:$0xff]
  %v297 = vld [vmem:[%s3 + $0x38] sm:$0xff]
  %v298 = vld [vmem:[%s3 + $0x40] sm:$0xff]
  %v299 = vld [vmem:[%s3 + $0x48] sm:$0xff]
  %v300 = vld [vmem:[%s3 + $0x50] sm:$0xff]
  %v301 = vld [vmem:[%s3 + $0x58] sm:$0xff]
  %v302 = vld [vmem:[%s3 + $0x60] sm:$0xff]
  %v303 = vld [vmem:[%s3 + $0x68] sm:$0xff]
  %v304 = vld [vmem:[%s3 + $0x70] sm:$0xff]
  %v305 = vld [vmem:[%s3 + $0x78] sm:$0xff]
  %v306 = vld [vmem:[%s3 + $0x80] sm:$0xff]
  %v307 = vld [vmem:[%s3 + $0x88] sm:$0xff]
  %v308 = vld [vmem:[%s3 + $0x90] sm:$0xff]
  %v309 = vld [vmem:[%s3 + $0x98] sm:$0xff]
  %v310 = vld [vmem:[%s3 + $0xa0] sm:$0xff]
  %v311 = vld [vmem:[%s3 + $0xa8] sm:$0xff]
  %v312 = vld [vmem:[%s3 + $0xb0] sm:$0xff]
  %v313 = vld [vmem:[%s3 + $0xb8] sm:$0xff]
  %v314 = vld [vmem:[%s3 + $0xc0] sm:$0xff]
  %v315 = vld [vmem:[%s3 + $0xc8] sm:$0xff]
  %v316 = vld [vmem:[%s3 + $0xd0] sm:$0xff]
  %v317 = vld [vmem:[%s3 + $0xd8] sm:$0xff]
  %v318 = vld [vmem:[%s3 + $0xe0] sm:$0xff]
  %v319 = vld [vmem:[%s3 + $0xe8] sm:$0xff]
  %v320 = vld [vmem:[%s3 + $0xf0] sm:$0xff]
  %v321 = vld [vmem:[%s3 + $0xf8] sm:$0xff]
  %v322 = vld [vmem:[%s4] sm:$0x1]
  %v324 = vlaneseq
  %v325 = vshrl.u32 %v324, 7
  %v326 = vsub.s32 0, %v325
  %v327 = vrot.slane %v322, %v326
  %329 = vmatprep.subr.mxu0 0.0
  %330 = vmatpush1.msra.mxu0 %v290
  %331 = vmatprep.subr.mxu0 0.0
  %332 = vmatpush1.msra.mxu0 %v291
  %333 = vmatprep.subr.mxu0 0.0
  %334 = vmatpush1.msra.mxu0 %v292
  %335 = vmatprep.subr.mxu0 0.0
  %336 = vmatpush1.msra.mxu0 %v293
  %337 = vmatprep.subr.mxu0 0.0
  %338 = vmatpush1.msra.mxu0 %v294
  %339 = vmatprep.subr.mxu0 0.0
  %340 = vmatpush1.msra.mxu0 %v295
  %341 = vmatprep.subr.mxu0 0.0
  %342 = vmatpush1.msra.mxu0 %v296
  %343 = vmatprep.subr.mxu0 0.0
  %344 = vmatpush1.msra.mxu0 %v297
  %345 = vmatprep.subr.mxu0 0.0
  %346 = vmatpush1.msra.mxu0 %v298
  %347 = vmatprep.subr.mxu0 0.0
  %348 = vmatpush1.msra.mxu0 %v299
  %349 = vmatprep.subr.mxu0 0.0
  %350 = vmatpush1.msra.mxu0 %v300
  %351 = vmatprep.subr.mxu0 0.0
  %352 = vmatpush1.msra.mxu0 %v301
  %353 = vmatprep.subr.mxu0 0.0
  %354 = vmatpush1.msra.mxu0 %v302
  %355 = vmatprep.subr.mxu0 0.0
  %356 = vmatpush1.msra.mxu0 %v303
  %357 = vmatprep.subr.mxu0 0.0
  %358 = vmatpush1.msra.mxu0 %v304
  %359 = vmatprep.subr.mxu0 0.0
  %360 = vmatpush1.msra.mxu0 %v305
  %361 = vmatprep.subr.mxu0 0.0
  %362 = vmatpush1.msra.mxu0 %v306
  %363 = vmatprep.subr.mxu0 0.0
  %364 = vmatpush1.msra.mxu0 %v307
  %365 = vmatprep.subr.mxu0 0.0
  %366 = vmatpush1.msra.mxu0 %v308
  %367 = vmatprep.subr.mxu0 0.0
  %368 = vmatpush1.msra.mxu0 %v309
  %369 = vmatprep.subr.mxu0 0.0
  %370 = vmatpush1.msra.mxu0 %v310
  %371 = vmatprep.subr.mxu0 0.0
  %372 = vmatpush1.msra.mxu0 %v311
  %373 = vmatprep.subr.mxu0 0.0
  %374 = vmatpush1.msra.mxu0 %v312
  %375 = vmatprep.subr.mxu0 0.0
  %376 = vmatpush1.msra.mxu0 %v313
  %377 = vmatprep.subr.mxu0 0.0
  %378 = vmatpush1.msra.mxu0 %v314
  %379 = vmatprep.subr.mxu0 0.0
  %380 = vmatpush1.msra.mxu0 %v315
  %381 = vmatprep.subr.mxu0 0.0
  %382 = vmatpush1.msra.mxu0 %v316
  %383 = vmatprep.subr.mxu0 0.0
  %384 = vmatpush1.msra.mxu0 %v317
  %385 = vmatprep.subr.mxu0 0.0
  %386 = vmatpush1.msra.mxu0 %v318
  %387 = vmatprep.subr.mxu0 0.0
  %388 = vmatpush1.msra.mxu0 %v319
  %389 = vmatprep.subr.mxu0 0.0
  %390 = vmatpush1.msra.mxu0 %v320
  %391 = vmatprep.subr.mxu0 0.0
  %392 = vmatpush1.msra.mxu0 %v321
  %393 = vmatprep.mubr.f32.mxu0 %v289
  %394 = vmatmul.mubr.f32.gmra.mrb[0].mxu0 %v288
  %v395 = vpop.f32.mrb[0].mxu0
  %v396 = vadd.f32 %v327, %v395
  %v397 = vpop.f32.mrb[0].mxu0
  %398 = vdwg.mxu0
  %v399 = vmax.f32 %v396, 0.0
  %v400 = vld [vmem:[%s5] sm:$0xff]
  %v401 = vld [vmem:[%s5 + $0x8] sm:$0xff]
  %v402 = vld [vmem:[%s5 + $0x10] sm:$0xff]
  %v403 = vld [vmem:[%s5 + $0x18] sm:$0xff]
  %v404 = vld [vmem:[%s5 + $0x20] sm:$0xff]
  %v405 = vld [vmem:[%s5 + $0x28] sm:$0xff]
  %v406 = vld [vmem:[%s5 + $0x30] sm:$0xff]
  %v407 = vld [vmem:[%s5 + $0x38] sm:$0xff]
  %v408 = vld [vmem:[%s5 + $0x40] sm:$0xff]
  %v409 = vld [vmem:[%s5 + $0x48] sm:$0xff]
  %v410 = vld [vmem:[%s5 + $0x50] sm:$0xff]
  %v411 = vld [vmem:[%s5 + $0x58] sm:$0xff]
  %v412 = vld [vmem:[%s5 + $0x60] sm:$0xff]
  %v413 = vld [vmem:[%s5 + $0x68] sm:$0xff]
  %v414 = vld [vmem:[%s5 + $0x70] sm:$0xff]
  %v415 = vld [vmem:[%s5 + $0x78] sm:$0xff]
  %v416 = vld [vmem:[%s6] sm:$0x1]
  %v418 = vlaneseq
  %v419 = vshrl.u32 %v418, 7
  %v420 = vsub.s32 0, %v419
  %v421 = vrot.slane %v416, %v420
  %423 = vmatprep.subr.mxu0 0.0
  %424 = vmatpush1.msra.mxu0 %v400
  %425 = vmatprep.subr.mxu0 0.0
  %426 = vmatpush1.msra.mxu0 %v401
  %427 = vmatprep.subr.mxu0 0.0
  %428 = vmatpush1.msra.mxu0 %v402
  %429 = vmatprep.subr.mxu0 0.0
  %430 = vmatpush1.msra.mxu0 %v403
  %431 = vmatprep.subr.mxu0 0.0
  %432 = vmatpush1.msra.mxu0 %v404
  %433 = vmatprep.subr.mxu0 0.0
  %434 = vmatpush1.msra.mxu0 %v405
  %435 = vmatprep.subr.mxu0 0.0
  %436 = vmatpush1.msra.mxu0 %v406
  %437 = vmatprep.subr.mxu0 0.0
  %438 = vmatpush1.msra.mxu0 %v407
  %439 = vmatprep.subr.mxu0 0.0
  %440 = vmatpush1.msra.mxu0 %v408
  %441 = vmatprep.subr.mxu0 0.0
  %442 = vmatpush1.msra.mxu0 %v409
  %443 = vmatprep.subr.mxu0 0.0
  %444 = vmatpush1.msra.mxu0 %v410
  %445 = vmatprep.subr.mxu0 0.0
  %446 = vmatpush1.msra.mxu0 %v411
  %447 = vmatprep.subr.mxu0 0.0
  %448 = vmatpush1.msra.mxu0 %v412
  %449 = vmatprep.subr.mxu0 0.0
  %450 = vmatpush1.msra.mxu0 %v413
  %451 = vmatprep.subr.mxu0 0.0
  %452 = vmatpush1.msra.mxu0 %v414
  %453 = vmatprep.subr.mxu0 0.0
  %454 = vmatpush1.msra.mxu0 %v415
  %455 = vmatprep.subr.mxu0 0.0
  %456 = vmatpush1.msra.mxu0 0.0
  %457 = vmatprep.subr.mxu0 0.0
  %458 = vmatpush1.msra.mxu0 0.0
  %459 = vmatprep.subr.mxu0 0.0
  %460 = vmatpush1.msra.mxu0 0.0
  %461 = vmatprep.subr.mxu0 0.0
  %462 = vmatpush1.msra.mxu0 0.0
  %463 = vmatprep.subr.mxu0 0.0
  %464 = vmatpush1.msra.mxu0 0.0
  %465 = vmatprep.subr.mxu0 0.0
  %466 = vmatpush1.msra.mxu0 0.0
  %467 = vmatprep.subr.mxu0 0.0
  %468 = vmatpush1.msra.mxu0 0.0
  %469 = vmatprep.subr.mxu0 0.0
  %470 = vmatpush1.msra.mxu0 0.0
  %471 = vmatprep.subr.mxu0 0.0
  %472 = vmatpush1.msra.mxu0 0.0
  %473 = vmatprep.subr.mxu0 0.0
  %474 = vmatpush1.msra.mxu0 0.0
  %475 = vmatprep.subr.mxu0 0.0
  %476 = vmatpush1.msra.mxu0 0.0
  %477 = vmatprep.subr.mxu0 0.0
  %478 = vmatpush1.msra.mxu0 0.0
  %479 = vmatprep.subr.mxu0 0.0
  %480 = vmatpush1.msra.mxu0 0.0
  %481 = vmatprep.subr.mxu0 0.0
  %482 = vmatpush1.msra.mxu0 0.0
  %483 = vmatprep.subr.mxu0 0.0
  %484 = vmatpush1.msra.mxu0 0.0
  %485 = vmatprep.subr.mxu0 0.0
  %486 = vmatpush1.msra.mxu0 0.0
  %487 = vmatprep.mubr.f32.mxu0 0.0
  %488 = vmatmul.mubr.f32.gmra.mrb[0].mxu0 %v399
  %v489 = vpop.f32.mrb[0].mxu0
  %v490 = vadd.f32 %v421, %v489
  %v491 = vpop.f32.mrb[0].mxu0
  %492 = vdwg.mxu0
  %493 = vst [vmem:[%s7] sm:$0xff] %v490
  // Predicated region
  $region30: #{network_forward.1} parent=0 // pred_check
    _
  $region31: #{network_forward.1} parent=0 // pred_check_branch
    %495 = sbr.rel (0) target = $region33
  $region32: #{network_forward.1} parent=0 // pred_region
    _
  $region33: #{network_forward.1} parent=0 // pred_fallthru
    _
  // Predicated region
  $region34: #{network_forward.1} parent=0 // pred_check
    _
  $region35: #{network_forward.1} parent=0 // pred_check_branch
    %497 = sbr.rel (0) target = $region37
  $region36: #{network_forward.1} parent=0 // pred_region
    _
  $region37: #{network_forward.1} parent=0 // pred_fallthru
    _

</llo_original>
